<compile_context>
chip_gen: v7x
topology: tpu7x:2x2x1
jax: 0.10.0
libtpu: 0.0.40
codegen_flags: <defaults>
</compile_context>

<pallas_src>
import jax
import jax.numpy as jnp
from jax.experimental import pallas as pl
from jax.experimental.pallas import tpu as pltpu


def _linsys_kernel(y_ref, a_ref, o_ref):
    # y_ref: (TM, W)   a_ref: (W, W) pre-transposed block-diag A (grid-resident)
    # o_ref: (TM, W)   out = y @ A_bd^T  (A_bd^T built once in the wrapper)
    o_ref[...] = jnp.dot(
        y_ref[...], a_ref[...], preferred_element_type=jnp.float32
    ).astype(o_ref.dtype)


def _tpu_generation():
    try:
        kind = jax.devices()[0].device_kind.lower()
    except Exception:
        kind = ""
    if "v7" in kind:
        return "v7x"
    if "v5" in kind:
        return "v5"
    return "v6"  # default / v6e


def simple_linear_system_forward(A, t, y, *, min_rows_for_pallas=4096):
    """A: (n, n), t: (T, B), y: (T, B, n) -> ((T, B, n), (T, B, n, n))."""
    T, B = t.shape
    n = A.shape[0]
    assert A.shape == (n, n) and y.shape == (T, B, n)
    M = T * B

    # Second output: A.unsqueeze(0).unsqueeze(0).expand(T, B, n, n).
    # Kept lazy; materializing it would dominate HBM write traffic (32x out1).
    out2 = jnp.broadcast_to(A[None, None, :, :], (T, B, n, n))

    # Small-problem bypass: launch + pipeline prologue dwarfs ~KiB of work.
    if M < min_rows_for_pallas:
        return jnp.einsum("ij,tbj->tbi", A, y), out2

    gen = _tpu_generation()

    # Group factor G: pack G rows of width n into one lane-dense row of width
    # G*n (free row-major reshape); block-diagonal A keeps groups independent.
    # v5e saturates at 128 lanes (G=4); v6e/v7x prefer 256-wide rows (G=8).
    g_prefs = (4, 2, 1) if gen == "v5" else (8, 4, 2, 1)
    G = next(g for g in g_prefs if M % g == 0)

    W = G * n
    Mg = M // G
    y_g = y.reshape(Mg, W)  # contiguous, free

    # One-time wrapper-side transpose + block-diag expansion of A.
    At = A.T
    A_rhs = At if G == 1 else jnp.kron(jnp.eye(G, dtype=A.dtype), At)  # (W, W)

    # Row tile: target several MiB of y per grid step so per-step overhead is
    # amortized; v7x (64 MiB VMEM) gets a smaller tile than v5e/v6e (128 MiB).
    bytes_per_row = W * 4
    target_tile_bytes = (4 << 20) if gen == "v7x" else (8 << 20)
    TM = max(8, target_tile_bytes // bytes_per_row)
    if TM >= Mg:
        TM = Mg  # full-extent block (no (8,128) divisibility requirement)
    else:
        TM = max(8, (TM // 8) * 8)
    grid = (pl.cdiv(Mg, TM),)

    # VMEM budget: 2 double-buffered y tiles + 2 out tiles + resident A_rhs.
    tile_bytes = TM * W * 4
    needed = 4 * tile_bytes + W * W * 4
    vmem_cap = (48 << 20) if gen == "v7x" else (100 << 20)
    vmem_limit = int(min(vmem_cap, max(32 << 20, int(needed * 1.25))))

    out_g = pl.pallas_call(
        _linsys_kernel,
        out_shape=jax.ShapeDtypeStruct((Mg, W), jnp.float32),
        grid=grid,
        in_specs=[
            pl.BlockSpec((TM, W), lambda i: (i, 0)),  # pipelined y row tiles
            pl.BlockSpec((W, W), lambda i: (0, 0)),   # A resident across tiles
        ],
        out_specs=pl.BlockSpec((TM, W), lambda i: (i, 0)),
        compiler_params=pltpu.CompilerParams(
            # Row tiles are independent. TODO(synk): verify 2-TensorCore
            # sharding on v7x in xprof; switch to pltpu.CORE_PARALLEL on this
            # axis if plain "parallel" does not split work across TCs.
            dimension_semantics=("parallel",),
            vmem_limit_bytes=vmem_limit,
        ),
    )(y_g, A_rhs)

    out1 = out_g.reshape(T, B, n)  # free reshape back to logical layout
    return out1, out2


def make_A(key, n):
    """Mirror torch init: A = Ap.transpose(0, 1) * Ap (elementwise)."""
    Ap = jax.random.uniform(key, (n, n), dtype=jnp.float32)
    return Ap.T * Ap


def y0(nbatch, n):
    """torch.outer(linspace(-1, 1, nbatch), linspace(1, 2, n))"""
    return jnp.outer(
        jnp.linspace(-1.0, 1.0, nbatch, dtype=jnp.float32),
        jnp.linspace(1.0, 2.0, n, dtype=jnp.float32),
    )


if __name__ == "__main__":
    key = jax.random.PRNGKey(0)
    k_a, k_t, k_y = jax.random.split(key, 3)

    n = 32  # system size
    T = 8   # time steps
    B = 2   # batch

    A = make_A(k_a, n)
    t = jax.random.uniform(k_t, (T, B), dtype=jnp.float32)
    y = jnp.broadcast_to(y0(B, n)[None, :, :], (T, B, n)) + 0.01 * jax.random.normal(
        k_y, (T, B, n), dtype=jnp.float32
    )

    # min_rows_for_pallas=0 forces the Pallas path so the kernel is exercised
    # even at this tiny demo shape (production default bypasses tiny M).
    out1, out2 = simple_linear_system_forward(A, t, y, min_rows_for_pallas=0)
    jax.block_until_ready((out1, out2))

    # Reference check in plain JAX.
    ref1 = jnp.einsum("ij,tbj->tbi", A, y)
    ref2 = jnp.broadcast_to(A[None, None, :, :], (T, B, n, n))
    assert out1.shape == (T, B, n) and out2.shape == (T, B, n, n)
    assert jnp.allclose(out1, ref1, atol=1e-5, rtol=1e-5)
    assert jnp.allclose(out2, ref2)

    print("KERNEL_OK")
</pallas_src>

<mosaic_0001>
module attributes {stable_mosaic.version = 11 : i64} {
  func.func @_linsys_kernel(%arg0: i32, %arg1: memref<2x256xf32, #tpu.memory_space<vmem>>, %arg2: memref<256x256xf32, #tpu.memory_space<vmem>>, %arg3: memref<2x256xf32, #tpu.memory_space<vmem>>) attributes {dimension_semantics = [#tpu.dimension_semantics<parallel>], iteration_bounds = array<i64: 1>, scalar_prefetch = 0 : i64, scratch_operands = 0 : i64, tpu.core_type = #tpu.core_type<tc>, window_params = [{transform_indices = @transform_0, window_bounds = array<i64: 2, 256>}, {pipeline_mode = #tpu.pipeline_mode<synchronous>, transform_indices = @transform_1, window_bounds = array<i64: 256, 256>}, {transform_indices = @transform_2, window_bounds = array<i64: 2, 256>}]} {
    %c0 = arith.constant 0 : index
    %c0_0 = arith.constant 0 : index
    %0 = vector.load %arg1[%c0, %c0_0] : memref<2x256xf32, #tpu.memory_space<vmem>>, vector<2x256xf32>
    %c0_1 = arith.constant 0 : index
    %c0_2 = arith.constant 0 : index
    %1 = vector.load %arg2[%c0_1, %c0_2] : memref<256x256xf32, #tpu.memory_space<vmem>>, vector<256x256xf32>
    %cst = arith.constant dense<0.000000e+00> : vector<2x256xf32>
    %2 = tpu.matmul %0, %1, %cst {dimension_numbers = #tpu.dot_dimension_numbers<[1], [0], [0], [1], [0, 0, 1, 1], [], []>} : vector<2x256xf32>, vector<256x256xf32>, vector<2x256xf32> -> vector<2x256xf32>
    %c0_3 = arith.constant 0 : index
    %c0_4 = arith.constant 0 : index
    %3 = vector.load %arg3[%c0_3, %c0_4] : memref<2x256xf32, #tpu.memory_space<vmem>>, vector<2x256xf32>
    tpu.vector_store %arg3[%c0_3, %c0_4], %2 {strides = array<i32>} : memref<2x256xf32, #tpu.memory_space<vmem>>, vector<2x256xf32>,
    return
  }
  func.func @transform_0(%arg0: i32) -> (i32, i32) {
    %c0_i32 = arith.constant 0 : i32
    %c0_i32_0 = arith.constant 0 : i32
    return %arg0, %c0_i32 : i32, i32
  }
  func.func @transform_1(%arg0: i32) -> (i32, i32) {
    %c0_i32 = arith.constant 0 : i32
    %c0_i32_0 = arith.constant 0 : i32
    %c0_i32_1 = arith.constant 0 : i32
    return %c0_i32, %c0_i32_0 : i32, i32
  }
  func.func @transform_2(%arg0: i32) -> (i32, i32) {
    %c0_i32 = arith.constant 0 : i32
    %c0_i32_0 = arith.constant 0 : i32
    return %arg0, %c0_i32 : i32, i32
  }
}

</mosaic_0001>

<llo_original>
// kernel: tpu_custom_call.1
$region0: #{tpu_custom_call.1}
  #allocation0 [shape = 'u32[]', space=smem, size = 0x4, offset = 0x4, fixed_abs, tag = 'smem constant byte address 0x4 - core index']
  #allocation1 [shape = 'u32[144,128]{1,0:T(1,128)}', space=vmem, size = 0x12000, scoped, tag = 'internal scratch']
  %s0 = inlined_call_operand.hbm [shape: f32[2,256], index: 0, kind: input, shape index: {}]
  %s1 = inlined_call_operand.hbm [shape: f32[256,256], index: 1, kind: input, shape index: {}]
  %s2 = inlined_call_operand.hbm [shape: f32[2,256], index: 2, kind: output, shape index: {}]
  %s3 = sld [smem:[#allocation0]]
  $region26: #{tpu_custom_call.1} parent=0
    _
  %s5 = ssub.s32 1, %s3
  %s6 = scalar_select 0, %s5, %s3
  $region1: #{tpu_custom_call.1} parent=0
    #allocation2 [shape = 'u8[2048]{0}', space=vmem, size = 0x800, scoped, tag = 'input window, operand 0, single buffered']
    #allocation3 [shape = 's32[1]{0}', space=sflag, size = 0x4, scoped, tag = 'scoped memory for tpu_custom_call.1']
    #allocation4 [shape = 's32[1]{0}', space=sflag, size = 0x4, scoped, tag = 'scoped memory for tpu_custom_call.1']
    #allocation5 [shape = 'u8[262144]{0}', space=vmem, size = 0x40000, scoped, tag = 'input window, operand 1, single buffered']
    #allocation6 [shape = 's32[1]{0}', space=sflag, size = 0x4, scoped, tag = 'scoped memory for tpu_custom_call.1']
    #allocation7 [shape = 'u8[2048]{0}', space=vmem, size = 0x800, scoped, tag = 'output window, operand 0, single buffered']
    %7 = vsyncpa [#allocation3], 0
    %8 = vsyncpa [#allocation6], 0
    %9 = vsyncpa [#allocation4], 0
    // Predicated region
    $region2: #{tpu_custom_call.1} parent=1 // pred_check
      _
    $region3: #{tpu_custom_call.1} parent=1 // pred_check_branch
      %11 = sbr.rel (0) target = $region5
    $region4: #{tpu_custom_call.1} parent=1 // pred_region
      %s13 = ssub.s32 64, 64
      %14 = vsyncadd [#allocation3], %s13
      %s16 = sshll.u32 [#allocation2], 4
      %s17 = int_to_ptr.vmem [resolvable:$true] %s16
      %19 = dma.hbm_to_vmem [thread:$0]  %s0, 64, %s17, [#allocation3]
    $region5: #{tpu_custom_call.1} parent=1 // pred_fallthru
      _
    // Predicated region
    $region6: #{tpu_custom_call.1} parent=1 // pred_check
      _
    $region7: #{tpu_custom_call.1} parent=1 // pred_check_branch
      %21 = sbr.rel (0) target = $region9
    $region8: #{tpu_custom_call.1} parent=1 // pred_region
      %s23 = ssub.s32 8192, 8192
      %24 = vsyncadd [#allocation6], %s23
      %s25 = sshll.u32 [#allocation5], 4
      %s26 = int_to_ptr.vmem [resolvable:$true] %s25
      %31 = dma.hbm_to_vmem [thread:$0]  %s1, 8192, %s26, [#allocation6], 256, 256, 16
    $region9: #{tpu_custom_call.1} parent=1 // pred_fallthru
      _
    // Predicated region
    $region10: #{tpu_custom_call.1} parent=1 // pred_check
      _
    $region11: #{tpu_custom_call.1} parent=1 // pred_check_branch
      %33 = sbr.rel (0) target = $region13
    $region12: #{tpu_custom_call.1} parent=1 // pred_region
      %34 = dma.done [#allocation3], 64
    $region13: #{tpu_custom_call.1} parent=1 // pred_fallthru
      _
    // Predicated region
    $region14: #{tpu_custom_call.1} parent=1 // pred_check
      _
    $region15: #{tpu_custom_call.1} parent=1 // pred_check_branch
      %36 = sbr.rel (0) target = $region17
    $region16: #{tpu_custom_call.1} parent=1 // pred_region
      %37 = dma.done [#allocation6], 8192
    $region17: #{tpu_custom_call.1} parent=1 // pred_fallthru
      _
    %v38 = vld [vmem:[#allocation2] sm:$0xf]
    %v39 = vld [vmem:[#allocation5] sm:$0xff]
    %v40 = vld [vmem:[#allocation5 + $0x8] sm:$0xff]
    %v41 = vld [vmem:[#allocation5 + $0x10] sm:$0xff]
    %v42 = vld [vmem:[#allocation5 + $0x18] sm:$0xff]
    %v43 = vld [vmem:[#allocation5 + $0x20] sm:$0xff]
    %v44 = vld [vmem:[#allocation5 + $0x28] sm:$0xff]
    %v45 = vld [vmem:[#allocation5 + $0x30] sm:$0xff]
    %v46 = vld [vmem:[#allocation5 + $0x38] sm:$0xff]
    %v47 = vld [vmem:[#allocation5 + $0x40] sm:$0xff]
    %v48 = vld [vmem:[#allocation5 + $0x48] sm:$0xff]
    %v49 = vld [vmem:[#allocation5 + $0x50] sm:$0xff]
    %v50 = vld [vmem:[#allocation5 + $0x58] sm:$0xff]
    %v51 = vld [vmem:[#allocation5 + $0x60] sm:$0xff]
    %v52 = vld [vmem:[#allocation5 + $0x68] sm:$0xff]
    %v53 = vld [vmem:[#allocation5 + $0x70] sm:$0xff]
    %v54 = vld [vmem:[#allocation5 + $0x78] sm:$0xff]
    %v55 = vld [vmem:[#allocation5 + $0x80] sm:$0xff]
    %v56 = vld [vmem:[#allocation5 + $0x88] sm:$0xff]
    %v57 = vld [vmem:[#allocation5 + $0x90] sm:$0xff]
    %v58 = vld [vmem:[#allocation5 + $0x98] sm:$0xff]
    %v59 = vld [vmem:[#allocation5 + $0xa0] sm:$0xff]
    %v60 = vld [vmem:[#allocation5 + $0xa8] sm:$0xff]
    %v61 = vld [vmem:[#allocation5 + $0xb0] sm:$0xff]
    %v62 = vld [vmem:[#allocation5 + $0xb8] sm:$0xff]
    %v63 = vld [vmem:[#allocation5 + $0xc0] sm:$0xff]
    %v64 = vld [vmem:[#allocation5 + $0xc8] sm:$0xff]
    %v65 = vld [vmem:[#allocation5 + $0xd0] sm:$0xff]
    %v66 = vld [vmem:[#allocation5 + $0xd8] sm:$0xff]
    %v67 = vld [vmem:[#allocation5 + $0xe0] sm:$0xff]
    %v68 = vld [vmem:[#allocation5 + $0xe8] sm:$0xff]
    %v69 = vld [vmem:[#allocation5 + $0xf0] sm:$0xff]
    %v70 = vld [vmem:[#allocation5 + $0xf8] sm:$0xff]
    %v71 = vld [vmem:[#allocation5 + $0x100] sm:$0xff]
    %v72 = vld [vmem:[#allocation5 + $0x108] sm:$0xff]
    %v73 = vld [vmem:[#allocation5 + $0x110] sm:$0xff]
    %v74 = vld [vmem:[#allocation5 + $0x118] sm:$0xff]
    %v75 = vld [vmem:[#allocation5 + $0x120] sm:$0xff]
    %v76 = vld [vmem:[#allocation5 + $0x128] sm:$0xff]
    %v77 = vld [vmem:[#allocation5 + $0x130] sm:$0xff]
    %v78 = vld [vmem:[#allocation5 + $0x138] sm:$0xff]
    %v79 = vld [vmem:[#allocation5 + $0x140] sm:$0xff]
    %v80 = vld [vmem:[#allocation5 + $0x148] sm:$0xff]
    %v81 = vld [vmem:[#allocation5 + $0x150] sm:$0xff]
    %v82 = vld [vmem:[#allocation5 + $0x158] sm:$0xff]
    %v83 = vld [vmem:[#allocation5 + $0x160] sm:$0xff]
    %v84 = vld [vmem:[#allocation5 + $0x168] sm:$0xff]
    %v85 = vld [vmem:[#allocation5 + $0x170] sm:$0xff]
    %v86 = vld [vmem:[#allocation5 + $0x178] sm:$0xff]
    %v87 = vld [vmem:[#allocation5 + $0x180] sm:$0xff]
    %v88 = vld [vmem:[#allocation5 + $0x188] sm:$0xff]
    %v89 = vld [vmem:[#allocation5 + $0x190] sm:$0xff]
    %v90 = vld [vmem:[#allocation5 + $0x198] sm:$0xff]
    %v91 = vld [vmem:[#allocation5 + $0x1a0] sm:$0xff]
    %v92 = vld [vmem:[#allocation5 + $0x1a8] sm:$0xff]
    %v93 = vld [vmem:[#allocation5 + $0x1b0] sm:$0xff]
    %v94 = vld [vmem:[#allocation5 + $0x1b8] sm:$0xff]
    %v95 = vld [vmem:[#allocation5 + $0x1c0] sm:$0xff]
    %v96 = vld [vmem:[#allocation5 + $0x1c8] sm:$0xff]
    %v97 = vld [vmem:[#allocation5 + $0x1d0] sm:$0xff]
    %v98 = vld [vmem:[#allocation5 + $0x1d8] sm:$0xff]
    %v99 = vld [vmem:[#allocation5 + $0x1e0] sm:$0xff]
    %v100 = vld [vmem:[#allocation5 + $0x1e8] sm:$0xff]
    %v101 = vld [vmem:[#allocation5 + $0x1f0] sm:$0xff]
    %v102 = vld [vmem:[#allocation5 + $0x1f8] sm:$0xff]
    %v105 = vunpack.c.l.s4 1983009808
    %v106 = vunpack.c.0.s8 %v105
    %v107 = vlaneseq
    %v108 = vshrl.u32 %v107, 7
    %v109 = vsub.s32 %v106, %v108
    %v110 = vrot.slane %v38, %v109
    %v111 = vcombine.high %v110, %v110
    %114 = vmatprep.subr.mxu0 %v40
    %115 = vmatpush1.msra.mxu0 %v39
    %116 = vmatprep.subr.mxu0 %v42
    %117 = vmatpush1.msra.mxu0 %v41
    %118 = vmatprep.subr.mxu0 %v44
    %119 = vmatpush1.msra.mxu0 %v43
    %120 = vmatprep.subr.mxu0 %v46
    %121 = vmatpush1.msra.mxu0 %v45
    %122 = vmatprep.subr.mxu0 %v48
    %123 = vmatpush1.msra.mxu0 %v47
    %124 = vmatprep.subr.mxu0 %v50
    %125 = vmatpush1.msra.mxu0 %v49
    %126 = vmatprep.subr.mxu0 %v52
    %127 = vmatpush1.msra.mxu0 %v51
    %128 = vmatprep.subr.mxu0 %v54
    %129 = vmatpush1.msra.mxu0 %v53
    %130 = vmatprep.subr.mxu0 %v56
    %131 = vmatpush1.msra.mxu0 %v55
    %132 = vmatprep.subr.mxu0 %v58
    %133 = vmatpush1.msra.mxu0 %v57
    %134 = vmatprep.subr.mxu0 %v60
    %135 = vmatpush1.msra.mxu0 %v59
    %136 = vmatprep.subr.mxu0 %v62
    %137 = vmatpush1.msra.mxu0 %v61
    %138 = vmatprep.subr.mxu0 %v64
    %139 = vmatpush1.msra.mxu0 %v63
    %140 = vmatprep.subr.mxu0 %v66
    %141 = vmatpush1.msra.mxu0 %v65
    %142 = vmatprep.subr.mxu0 %v68
    %143 = vmatpush1.msra.mxu0 %v67
    %144 = vmatprep.subr.mxu0 %v70
    %145 = vmatpush1.msra.mxu0 %v69
    %146 = vmatprep.subr.mxu0 %v72
    %147 = vmatpush1.msra.mxu0 %v71
    %148 = vmatprep.subr.mxu0 %v74
    %149 = vmatpush1.msra.mxu0 %v73
    %150 = vmatprep.subr.mxu0 %v76
    %151 = vmatpush1.msra.mxu0 %v75
    %152 = vmatprep.subr.mxu0 %v78
    %153 = vmatpush1.msra.mxu0 %v77
    %154 = vmatprep.subr.mxu0 %v80
    %155 = vmatpush1.msra.mxu0 %v79
    %156 = vmatprep.subr.mxu0 %v82
    %157 = vmatpush1.msra.mxu0 %v81
    %158 = vmatprep.subr.mxu0 %v84
    %159 = vmatpush1.msra.mxu0 %v83
    %160 = vmatprep.subr.mxu0 %v86
    %161 = vmatpush1.msra.mxu0 %v85
    %162 = vmatprep.subr.mxu0 %v88
    %163 = vmatpush1.msra.mxu0 %v87
    %164 = vmatprep.subr.mxu0 %v90
    %165 = vmatpush1.msra.mxu0 %v89
    %166 = vmatprep.subr.mxu0 %v92
    %167 = vmatpush1.msra.mxu0 %v91
    %168 = vmatprep.subr.mxu0 %v94
    %169 = vmatpush1.msra.mxu0 %v93
    %170 = vmatprep.subr.mxu0 %v96
    %171 = vmatpush1.msra.mxu0 %v95
    %172 = vmatprep.subr.mxu0 %v98
    %173 = vmatpush1.msra.mxu0 %v97
    %174 = vmatprep.subr.mxu0 %v100
    %175 = vmatpush1.msra.mxu0 %v99
    %176 = vmatprep.subr.mxu0 %v102
    %177 = vmatpush1.msra.mxu0 %v101
    %178 = vmatprep.mubr.f32.mxu0 %v111
    %179 = vmatmul.mubr.f32.gmra.mrb[0].mxu0 %v110
    %v180 = vpop.f32.mrb[0].mxu0
    %v181 = vadd.f32 0.0, %v180
    %v182 = vpop.f32.mrb[0].mxu0
    %v183 = vadd.f32 0.0, %v182
    %184 = vdwg.mxu0
    %v187 = vcombine.low %v181, %v183
    %v189 = vunpack.c.l.s4 1983009808
    %v190 = vunpack.c.0.s8 %v189
    %v191 = vlaneseq
    %v192 = vshrl.u32 %v191, 7
    %v193 = vsub.s32 %v190, %v192
    %v194 = vrot.slane %v187, %v193
    %196 = vst [vmem:[#allocation7] sm:$0xf] %v194
    // Predicated region
    $region18: #{tpu_custom_call.1} parent=1 // pred_check
      _
    $region19: #{tpu_custom_call.1} parent=1 // pred_check_branch
      %198 = sbr.rel (0) target = $region21
    $region20: #{tpu_custom_call.1} parent=1 // pred_region
      %s200 = ssub.s32 64, 64
      %201 = vsyncadd [#allocation4], %s200
      %s203 = sshll.u32 [#allocation7], 4
      %s204 = int_to_ptr.vmem [resolvable:$true] %s203
      %206 = dma.vmem_to_hbm [thread:$0]  %s204, 64, %s2, [#allocation4]
    $region21: #{tpu_custom_call.1} parent=1 // pred_fallthru
      _
    // Predicated region
    $region22: #{tpu_custom_call.1} parent=1 // pred_check
      _
    $region23: #{tpu_custom_call.1} parent=1 // pred_check_branch
      %208 = sbr.rel (0) target = $region25
    $region24: #{tpu_custom_call.1} parent=1 // pred_region
      %209 = dma.done [#allocation4], 64
    $region25: #{tpu_custom_call.1} parent=1 // pred_fallthru
      _
    %210 = vsyncpa [#allocation3], 1
    %211 = vsyncpa [#allocation6], 1
    %212 = vsyncpa [#allocation4], 1

</llo_original>
